<compile_context>
chip_gen: v5e
topology: v5e:2x2
jax: 0.10.0
libtpu: 0.0.40
codegen_flags: <defaults>
</compile_context>

<pallas_src>
import jax
import jax.numpy as jnp
from jax import lax
from jax.experimental import pallas as pl
from jax.experimental.pallas import tpu as pltpu

_LANE = 128


def _linear_kernel(b_ref, x_ref, w_ref, o_ref):
    # b_ref: SMEM (1,)            bias scalar
    # x_ref: VMEM (TR, IN*128)    128 samples per row, features interleaved
    # w_ref: VMEM (IN*128, 128)   block-diagonal weight, VMEM-resident
    # o_ref: VMEM (TR, 128)       lane-dense output (128 samples per row)
    acc = jnp.dot(
        x_ref[...],
        w_ref[...],
        preferred_element_type=jnp.float32,
        precision=lax.Precision.HIGHEST,
    )
    o_ref[...] = (acc + b_ref[0]).astype(o_ref.dtype)


def _round_up(n, m):
    return ((n + m - 1) // m) * m


def net_forward(x, weight, bias, *, max_row_tile=2048):
    """Forward pass of Net: fc = Linear(IN, 1).  x: (B, IN) -> (B, 1)."""
    B, IN = x.shape
    OUT = weight.shape[0]
    if OUT != 1:
        raise NotImplementedError("kernel is specialized to Linear(IN, 1)")
    dtype = x.dtype

    # 128 samples per row: pad the batch to a multiple of 128 (extra HBM pass
    # only when B % 128 != 0; the reshape itself is a free row-major bitcast).
    Bp = _round_up(max(B, 1), _LANE)
    xp = x if Bp == B else jnp.pad(x, ((0, Bp - B), (0, 0)))
    R = Bp // _LANE
    x3 = xp.reshape(R, IN * _LANE)

    # Block-diagonal weight: W2[IN*l + f, l] = weight[0, f].
    wvec = weight.reshape(IN).astype(jnp.float32)
    w2 = (jnp.eye(_LANE, dtype=jnp.float32)[:, None, :]
          * wvec[None, :, None]).reshape(IN * _LANE, _LANE).astype(dtype)

    # Row tile selection (see header): cap at 2048 rows; if the whole batch
    # would fit in one tile, split into two so both v7x TCs work.
    if R < 16:
        TR = R
    elif R <= max_row_tile:
        TR = _round_up(pl.cdiv(R, 2), 8)
    else:
        TR = max_row_tile
    grid_r = pl.cdiv(R, TR)   # ragged last tile is handled by Pallas

    itemsize = jnp.dtype(dtype).itemsize
    cost = pl.CostEstimate(
        flops=2 * R * (IN * _LANE) * _LANE,
        transcendentals=0,
        bytes_accessed=(Bp * IN + Bp * OUT + IN * _LANE * _LANE) * itemsize
        + OUT * 4,
    )

    out = pl.pallas_call(
        _linear_kernel,
        out_shape=jax.ShapeDtypeStruct((R, _LANE), dtype),
        grid_spec=pltpu.PrefetchScalarGridSpec(
            num_scalar_prefetch=0,
            grid=(grid_r,),
            in_specs=[
                # bias: tiny -> SMEM scalar, no VMEM tile.
                pl.BlockSpec(memory_space=pltpu.MemorySpace.SMEM),
                # x rows: marches over the batch, double-buffered by Pallas.
                pl.BlockSpec((TR, IN * _LANE), lambda i: (i, 0)),
                # block-diagonal weight: same block every step -> VMEM resident.
                pl.BlockSpec((IN * _LANE, _LANE), lambda i: (0, 0)),
            ],
            out_specs=pl.BlockSpec((TR, _LANE), lambda i: (i, 0)),
        ),
        compiler_params=pltpu.CompilerParams(
            # Independent batch tiles -> shard across both TCs on v7x.
            dimension_semantics=("parallel",),
        ),
        cost_estimate=cost,
    )(bias.astype(jnp.float32), x3, w2)

    y = out.reshape(Bp, OUT)                    # free bitcast back to (Bp, 1)
    return y if Bp == B else y[:B]


if __name__ == "__main__":
    key = jax.random.PRNGKey(0)
    k_x, k_w, k_b = jax.random.split(key, 3)

    B, IN, OUT = 8, 4, 1

    # PyTorch-style init: uniform(-1/sqrt(IN), 1/sqrt(IN))
    bound = 1.0 / jnp.sqrt(jnp.float32(IN))
    weight = jax.random.uniform(k_w, (OUT, IN), jnp.float32, -bound, bound)
    bias = jax.random.uniform(k_b, (OUT,), jnp.float32, -bound, bound)

    x = jax.random.normal(k_x, (B, IN), jnp.float32)

    y = net_forward(x, weight, bias)
    y = jax.block_until_ready(y)

    # Reference in plain JAX (elementwise mul + sum: exact f32, no matmul
    # precision ambiguity on the reference side).
    y_ref = jnp.sum(x * weight[0][None, :], axis=-1, keepdims=True) + bias
    assert y.shape == (B, OUT)
    assert jnp.allclose(y, y_ref, atol=1e-5, rtol=1e-5)

    print("KERNEL_OK")
</pallas_src>

<mosaic_0001>
module attributes {stable_mosaic.version = 11 : i64} {
  func.func @_linear_kernel(%arg0: i32, %arg1: memref<1xf32, #tpu.memory_space<smem>>, %arg2: memref<1x512xf32, #tpu.memory_space<vmem>>, %arg3: memref<512x128xf32, #tpu.memory_space<vmem>>, %arg4: memref<1x128xf32, #tpu.memory_space<vmem>>) attributes {dimension_semantics = [#tpu.dimension_semantics<parallel>], iteration_bounds = array<i64: 1>, scalar_prefetch = 0 : i64, scratch_operands = 0 : i64, tpu.core_type = #tpu.core_type<tc>, window_params = [{transform_indices = @transform_0, window_bounds = array<i64: 1>}, {transform_indices = @transform_1, window_bounds = array<i64: 1, 512>}, {pipeline_mode = #tpu.pipeline_mode<synchronous>, transform_indices = @transform_2, window_bounds = array<i64: 512, 128>}, {transform_indices = @transform_3, window_bounds = array<i64: 1, 128>}]} {
    %c0 = arith.constant 0 : index
    %c0_0 = arith.constant 0 : index
    %0 = vector.load %arg2[%c0, %c0_0] : memref<1x512xf32, #tpu.memory_space<vmem>>, vector<1x512xf32>
    %c0_1 = arith.constant 0 : index
    %c0_2 = arith.constant 0 : index
    %1 = vector.load %arg3[%c0_1, %c0_2] : memref<512x128xf32, #tpu.memory_space<vmem>>, vector<512x128xf32>
    %cst = arith.constant dense<0.000000e+00> : vector<1x128xf32>
    %2 = tpu.matmul %0, %1, %cst {dimension_numbers = #tpu.dot_dimension_numbers<[1], [0], [0], [1], [0, 0, 1, 1], [], []>, precision = #tpu.contract_precision<fp32>} : vector<1x512xf32>, vector<512x128xf32>, vector<1x128xf32> -> vector<1x128xf32>
    %c0_3 = arith.constant 0 : index
    %3 = memref.load %arg1[%c0_3] : memref<1xf32, #tpu.memory_space<smem>>
    %4 = vector.broadcast %3 : f32 to vector<1x128xf32>
    %5 = arith.addf %2, %4 : vector<1x128xf32>
    %c0_4 = arith.constant 0 : index
    %c0_5 = arith.constant 0 : index
    %6 = vector.load %arg4[%c0_4, %c0_5] : memref<1x128xf32, #tpu.memory_space<vmem>>, vector<1x128xf32>
    tpu.vector_store %arg4[%c0_4, %c0_5], %5 {strides = array<i32>} : memref<1x128xf32, #tpu.memory_space<vmem>>, vector<1x128xf32>,
    return
  }
  func.func @transform_0(%arg0: i32) -> i32 {
    %c0_i32 = arith.constant 0 : i32
    %c0_i32_0 = arith.constant 0 : i32
    return %c0_i32 : i32
  }
  func.func @transform_1(%arg0: i32) -> (i32, i32) {
    %c0_i32 = arith.constant 0 : i32
    %c0_i32_0 = arith.constant 0 : i32
    return %arg0, %c0_i32 : i32, i32
  }
  func.func @transform_2(%arg0: i32) -> (i32, i32) {
    %c0_i32 = arith.constant 0 : i32
    %c0_i32_0 = arith.constant 0 : i32
    %c0_i32_1 = arith.constant 0 : i32
    return %c0_i32, %c0_i32_0 : i32, i32
  }
  func.func @transform_3(%arg0: i32) -> (i32, i32) {
    %c0_i32 = arith.constant 0 : i32
    %c0_i32_0 = arith.constant 0 : i32
    return %arg0, %c0_i32 : i32, i32
  }
}

</mosaic_0001>

<llo_original>
// kernel: tpu_custom_call.1
$region0: #{tpu_custom_call.1}
  #allocation0 [shape = 'u32[]', space=smem, size = 0x4, offset = 0x4, fixed_abs, tag = 'smem constant byte address 0x4 - core index']
  #allocation1 [shape = 'u32[72,128]{1,0:T(1,128)}', space=vmem, size = 0x9000, scoped, tag = 'internal scratch']
  #allocation2 [shape = 'f32[1]{0:T(128)S(6)}', space=smem, size = 0x200, scoped, tag = 'scoped memory for tpu_custom_call.1']
  %s0 = inlined_call_operand.<no memory space> [shape: f32[1], index: 0, kind: input, shape index: {}]
  %s1 = inlined_call_operand.hbm [shape: f32[1,512], index: 1, kind: input, shape index: {}]
  %s2 = inlined_call_operand.hbm [shape: f32[512,128], index: 2, kind: input, shape index: {}]
  %s3 = inlined_call_operand.hbm [shape: f32[1,128], index: 3, kind: output, shape index: {}]
  %s4 = sld [smem:[#allocation0]]
  $region30: #{tpu_custom_call.1} parent=0
    _
  %s6 = ssub.s32 1, %s4
  %s7 = scalar_select 0, %s6, %s4
  %8 = sst [smem:[#allocation2]] %s0
  $region1: #{tpu_custom_call.1} parent=0
    #allocation3 [shape = 'u8[2048]{0}', space=vmem, size = 0x800, scoped, tag = 'input window, operand 1, single buffered']
    #allocation4 [shape = 's32[1]{0}', space=sflag, size = 0x4, scoped, tag = 'scoped memory for tpu_custom_call.1']
    #allocation5 [shape = 's32[1]{0}', space=sflag, size = 0x4, scoped, tag = 'scoped memory for tpu_custom_call.1']
    #allocation6 [shape = 'u8[262144]{0}', space=vmem, size = 0x40000, scoped, tag = 'input window, operand 2, single buffered']
    #allocation7 [shape = 's32[1]{0}', space=sflag, size = 0x4, scoped, tag = 'scoped memory for tpu_custom_call.1']
    #allocation8 [shape = 'u8[512]{0}', space=vmem, size = 0x400, scoped, tag = 'output window, operand 0, single buffered']
    %9 = vsyncpa [#allocation4], 0
    %10 = vsyncpa [#allocation7], 0
    %11 = vsyncpa [#allocation5], 0
    // Predicated region
    $region2: #{tpu_custom_call.1} parent=1 // pred_check
      _
    $region3: #{tpu_custom_call.1} parent=1 // pred_check_branch
      %13 = sbr.rel (0) target = $region5
    $region4: #{tpu_custom_call.1} parent=1 // pred_region
      _
    $region5: #{tpu_custom_call.1} parent=1 // pred_fallthru
      _
    // Predicated region
    $region6: #{tpu_custom_call.1} parent=1 // pred_check
      _
    $region7: #{tpu_custom_call.1} parent=1 // pred_check_branch
      %15 = sbr.rel (0) target = $region9
    $region8: #{tpu_custom_call.1} parent=1 // pred_region
      %17 = vsyncadd [#allocation4], 0
      %s19 = sshll.u32 %s1, 4
      %s20 = int_to_ptr.hbm [resolvable:$true] %s19
      %s21 = sshll.u32 [#allocation3], 4
      %s22 = int_to_ptr.vmem [resolvable:$true] %s21
      %24 = dma.hbm_to_vmem [thread:$0]  %s20, 64, %s22, [#allocation4]
    $region9: #{tpu_custom_call.1} parent=1 // pred_fallthru
      _
    // Predicated region
    $region10: #{tpu_custom_call.1} parent=1 // pred_check
      _
    $region11: #{tpu_custom_call.1} parent=1 // pred_check_branch
      %26 = sbr.rel (0) target = $region13
    $region12: #{tpu_custom_call.1} parent=1 // pred_region
      %28 = vsyncadd [#allocation7], 0
      %s29 = sshll.u32 %s2, 4
      %s30 = int_to_ptr.hbm [resolvable:$true] %s29
      %s31 = sshll.u32 [#allocation6], 4
      %s32 = int_to_ptr.vmem [resolvable:$true] %s31
      %37 = dma.hbm_to_vmem [thread:$0]  %s30, 8192, %s32, [#allocation7], 128, 128, 8
    $region13: #{tpu_custom_call.1} parent=1 // pred_fallthru
      _
    // Predicated region
    $region14: #{tpu_custom_call.1} parent=1 // pred_check
      _
    $region15: #{tpu_custom_call.1} parent=1 // pred_check_branch
      %39 = sbr.rel (0) target = $region17
    $region16: #{tpu_custom_call.1} parent=1 // pred_region
      %41 = dma.done [#allocation4], 64
    $region17: #{tpu_custom_call.1} parent=1 // pred_fallthru
      _
    // Predicated region
    $region18: #{tpu_custom_call.1} parent=1 // pred_check
      _
    $region19: #{tpu_custom_call.1} parent=1 // pred_check_branch
      %43 = sbr.rel (0) target = $region21
    $region20: #{tpu_custom_call.1} parent=1 // pred_region
      %45 = dma.done [#allocation7], 8192
    $region21: #{tpu_custom_call.1} parent=1 // pred_fallthru
      _
    %v46 = vld [vmem:[#allocation3] sm:$0xf]
    %v47 = vld [vmem:[#allocation6] sm:$0xff]
    %v48 = vld [vmem:[#allocation6 + $0x8] sm:$0xff]
    %v49 = vld [vmem:[#allocation6 + $0x10] sm:$0xff]
    %v50 = vld [vmem:[#allocation6 + $0x18] sm:$0xff]
    %v51 = vld [vmem:[#allocation6 + $0x20] sm:$0xff]
    %v52 = vld [vmem:[#allocation6 + $0x28] sm:$0xff]
    %v53 = vld [vmem:[#allocation6 + $0x30] sm:$0xff]
    %v54 = vld [vmem:[#allocation6 + $0x38] sm:$0xff]
    %v55 = vld [vmem:[#allocation6 + $0x40] sm:$0xff]
    %v56 = vld [vmem:[#allocation6 + $0x48] sm:$0xff]
    %v57 = vld [vmem:[#allocation6 + $0x50] sm:$0xff]
    %v58 = vld [vmem:[#allocation6 + $0x58] sm:$0xff]
    %v59 = vld [vmem:[#allocation6 + $0x60] sm:$0xff]
    %v60 = vld [vmem:[#allocation6 + $0x68] sm:$0xff]
    %v61 = vld [vmem:[#allocation6 + $0x70] sm:$0xff]
    %v62 = vld [vmem:[#allocation6 + $0x78] sm:$0xff]
    %v63 = vld [vmem:[#allocation6 + $0x80] sm:$0xff]
    %v64 = vld [vmem:[#allocation6 + $0x88] sm:$0xff]
    %v65 = vld [vmem:[#allocation6 + $0x90] sm:$0xff]
    %v66 = vld [vmem:[#allocation6 + $0x98] sm:$0xff]
    %v67 = vld [vmem:[#allocation6 + $0xa0] sm:$0xff]
    %v68 = vld [vmem:[#allocation6 + $0xa8] sm:$0xff]
    %v69 = vld [vmem:[#allocation6 + $0xb0] sm:$0xff]
    %v70 = vld [vmem:[#allocation6 + $0xb8] sm:$0xff]
    %v71 = vld [vmem:[#allocation6 + $0xc0] sm:$0xff]
    %v72 = vld [vmem:[#allocation6 + $0xc8] sm:$0xff]
    %v73 = vld [vmem:[#allocation6 + $0xd0] sm:$0xff]
    %v74 = vld [vmem:[#allocation6 + $0xd8] sm:$0xff]
    %v75 = vld [vmem:[#allocation6 + $0xe0] sm:$0xff]
    %v76 = vld [vmem:[#allocation6 + $0xe8] sm:$0xff]
    %v77 = vld [vmem:[#allocation6 + $0xf0] sm:$0xff]
    %v78 = vld [vmem:[#allocation6 + $0xf8] sm:$0xff]
    %v79 = vld [vmem:[#allocation6 + $0x100] sm:$0xff]
    %v80 = vld [vmem:[#allocation6 + $0x108] sm:$0xff]
    %v81 = vld [vmem:[#allocation6 + $0x110] sm:$0xff]
    %v82 = vld [vmem:[#allocation6 + $0x118] sm:$0xff]
    %v83 = vld [vmem:[#allocation6 + $0x120] sm:$0xff]
    %v84 = vld [vmem:[#allocation6 + $0x128] sm:$0xff]
    %v85 = vld [vmem:[#allocation6 + $0x130] sm:$0xff]
    %v86 = vld [vmem:[#allocation6 + $0x138] sm:$0xff]
    %v87 = vld [vmem:[#allocation6 + $0x140] sm:$0xff]
    %v88 = vld [vmem:[#allocation6 + $0x148] sm:$0xff]
    %v89 = vld [vmem:[#allocation6 + $0x150] sm:$0xff]
    %v90 = vld [vmem:[#allocation6 + $0x158] sm:$0xff]
    %v91 = vld [vmem:[#allocation6 + $0x160] sm:$0xff]
    %v92 = vld [vmem:[#allocation6 + $0x168] sm:$0xff]
    %v93 = vld [vmem:[#allocation6 + $0x170] sm:$0xff]
    %v94 = vld [vmem:[#allocation6 + $0x178] sm:$0xff]
    %v95 = vld [vmem:[#allocation6 + $0x180] sm:$0xff]
    %v96 = vld [vmem:[#allocation6 + $0x188] sm:$0xff]
    %v97 = vld [vmem:[#allocation6 + $0x190] sm:$0xff]
    %v98 = vld [vmem:[#allocation6 + $0x198] sm:$0xff]
    %v99 = vld [vmem:[#allocation6 + $0x1a0] sm:$0xff]
    %v100 = vld [vmem:[#allocation6 + $0x1a8] sm:$0xff]
    %v101 = vld [vmem:[#allocation6 + $0x1b0] sm:$0xff]
    %v102 = vld [vmem:[#allocation6 + $0x1b8] sm:$0xff]
    %v103 = vld [vmem:[#allocation6 + $0x1c0] sm:$0xff]
    %v104 = vld [vmem:[#allocation6 + $0x1c8] sm:$0xff]
    %v105 = vld [vmem:[#allocation6 + $0x1d0] sm:$0xff]
    %v106 = vld [vmem:[#allocation6 + $0x1d8] sm:$0xff]
    %v107 = vld [vmem:[#allocation6 + $0x1e0] sm:$0xff]
    %v108 = vld [vmem:[#allocation6 + $0x1e8] sm:$0xff]
    %v109 = vld [vmem:[#allocation6 + $0x1f0] sm:$0xff]
    %v110 = vld [vmem:[#allocation6 + $0x1f8] sm:$0xff]
    %s111 = sld [smem:[#allocation2]]
    %v112 = vstv %s111
    %v114 = vperm.slane %v46, 0
    %v115 = vperm.slane %v46, 1
    %v116 = vperm.slane %v46, 2
    %v117 = vperm.slane %v46, 3
    %v122 = vand.u32 %v62, 4294901760
    %123 = vmatpush.msra.mxu0 %v122
    %v124 = vand.u32 %v61, 4294901760
    %125 = vmatpush.msra.mxu0 %v124
    %v126 = vand.u32 %v60, 4294901760
    %127 = vmatpush.msra.mxu0 %v126
    %v128 = vand.u32 %v59, 4294901760
    %129 = vmatpush.msra.mxu0 %v128
    %v130 = vand.u32 %v58, 4294901760
    %131 = vmatpush.msra.mxu0 %v130
    %v132 = vand.u32 %v57, 4294901760
    %133 = vmatpush.msra.mxu0 %v132
    %v134 = vand.u32 %v56, 4294901760
    %135 = vmatpush.msra.mxu0 %v134
    %v136 = vand.u32 %v55, 4294901760
    %137 = vmatpush.msra.mxu0 %v136
    %v138 = vand.u32 %v54, 4294901760
    %139 = vmatpush.msra.mxu0 %v138
    %v140 = vand.u32 %v53, 4294901760
    %141 = vmatpush.msra.mxu0 %v140
    %v142 = vand.u32 %v52, 4294901760
    %143 = vmatpush.msra.mxu0 %v142
    %v144 = vand.u32 %v51, 4294901760
    %145 = vmatpush.msra.mxu0 %v144
    %v146 = vand.u32 %v50, 4294901760
    %147 = vmatpush.msra.mxu0 %v146
    %v148 = vand.u32 %v49, 4294901760
    %149 = vmatpush.msra.mxu0 %v148
    %v150 = vand.u32 %v48, 4294901760
    %151 = vmatpush.msra.mxu0 %v150
    %v152 = vand.u32 %v47, 4294901760
    %153 = vmatpush.msra.mxu0 %v152
    %v154 = vand.u32 %v114, 4294901760
    %v155 = vsub.f32 %v114, %v154
    %v156 = vand.u32 %v155, 4294901760
    %v157 = vsub.f32 %v155, %v156
    %v158 = vand.u32 %v157, 4294901760
    %159 = vmatmul.f32.gmra.mxu0 %v158
    %v160 = vpop.f32.mrf.mxu0
    %v161 = vadd.f32 %v112, %v160
    %162 = vdwg.mxu0
    %v163 = vand.u32 %v62, 4294901760
    %v164 = vsub.f32 %v62, %v163
    %v165 = vand.u32 %v164, 4294901760
    %v166 = vsub.f32 %v164, %v165
    %v167 = vand.u32 %v166, 4294901760
    %168 = vmatpush.msra.mxu0 %v167
    %v169 = vand.u32 %v61, 4294901760
    %v170 = vsub.f32 %v61, %v169
    %v171 = vand.u32 %v170, 4294901760
    %v172 = vsub.f32 %v170, %v171
    %v173 = vand.u32 %v172, 4294901760
    %174 = vmatpush.msra.mxu0 %v173
    %v175 = vand.u32 %v60, 4294901760
    %v176 = vsub.f32 %v60, %v175
    %v177 = vand.u32 %v176, 4294901760
    %v178 = vsub.f32 %v176, %v177
    %v179 = vand.u32 %v178, 4294901760
    %180 = vmatpush.msra.mxu0 %v179
    %v181 = vand.u32 %v59, 4294901760
    %v182 = vsub.f32 %v59, %v181
    %v183 = vand.u32 %v182, 4294901760
    %v184 = vsub.f32 %v182, %v183
    %v185 = vand.u32 %v184, 4294901760
    %186 = vmatpush.msra.mxu0 %v185
    %v187 = vand.u32 %v58, 4294901760
    %v188 = vsub.f32 %v58, %v187
    %v189 = vand.u32 %v188, 4294901760
    %v190 = vsub.f32 %v188, %v189
    %v191 = vand.u32 %v190, 4294901760
    %192 = vmatpush.msra.mxu0 %v191
    %v193 = vand.u32 %v57, 4294901760
    %v194 = vsub.f32 %v57, %v193
    %v195 = vand.u32 %v194, 4294901760
    %v196 = vsub.f32 %v194, %v195
    %v197 = vand.u32 %v196, 4294901760
    %198 = vmatpush.msra.mxu0 %v197
    %v199 = vand.u32 %v56, 4294901760
    %v200 = vsub.f32 %v56, %v199
    %v201 = vand.u32 %v200, 4294901760
    %v202 = vsub.f32 %v200, %v201
    %v203 = vand.u32 %v202, 4294901760
    %204 = vmatpush.msra.mxu0 %v203
    %v205 = vand.u32 %v55, 4294901760
    %v206 = vsub.f32 %v55, %v205
    %v207 = vand.u32 %v206, 4294901760
    %v208 = vsub.f32 %v206, %v207
    %v209 = vand.u32 %v208, 4294901760
    %210 = vmatpush.msra.mxu0 %v209
    %v211 = vand.u32 %v54, 4294901760
    %v212 = vsub.f32 %v54, %v211
    %v213 = vand.u32 %v212, 4294901760
    %v214 = vsub.f32 %v212, %v213
    %v215 = vand.u32 %v214, 4294901760
    %216 = vmatpush.msra.mxu0 %v215
    %v217 = vand.u32 %v53, 4294901760
    %v218 = vsub.f32 %v53, %v217
    %v219 = vand.u32 %v218, 4294901760
    %v220 = vsub.f32 %v218, %v219
    %v221 = vand.u32 %v220, 4294901760
    %222 = vmatpush.msra.mxu0 %v221
    %v223 = vand.u32 %v52, 4294901760
    %v224 = vsub.f32 %v52, %v223
    %v225 = vand.u32 %v224, 4294901760
    %v226 = vsub.f32 %v224, %v225
    %v227 = vand.u32 %v226, 4294901760
    %228 = vmatpush.msra.mxu0 %v227
    %v229 = vand.u32 %v51, 4294901760
    %v230 = vsub.f32 %v51, %v229
    %v231 = vand.u32 %v230, 4294901760
    %v232 = vsub.f32 %v230, %v231
    %v233 = vand.u32 %v232, 4294901760
    %234 = vmatpush.msra.mxu0 %v233
    %v235 = vand.u32 %v50, 4294901760
    %v236 = vsub.f32 %v50, %v235
    %v237 = vand.u32 %v236, 4294901760
    %v238 = vsub.f32 %v236, %v237
    %v239 = vand.u32 %v238, 4294901760
    %240 = vmatpush.msra.mxu0 %v239
    %v241 = vand.u32 %v49, 4294901760
    %v242 = vsub.f32 %v49, %v241
    %v243 = vand.u32 %v242, 4294901760
    %v244 = vsub.f32 %v242, %v243
    %v245 = vand.u32 %v244, 4294901760
    %246 = vmatpush.msra.mxu0 %v245
    %v247 = vand.u32 %v48, 4294901760
    %v248 = vsub.f32 %v48, %v247
    %v249 = vand.u32 %v248, 4294901760
    %v250 = vsub.f32 %v248, %v249
    %v251 = vand.u32 %v250, 4294901760
    %252 = vmatpush.msra.mxu0 %v251
    %v253 = vand.u32 %v47, 4294901760
    %v254 = vsub.f32 %v47, %v253
    %v255 = vand.u32 %v254, 4294901760
    %v256 = vsub.f32 %v254, %v255
    %v257 = vand.u32 %v256, 4294901760
    %258 = vmatpush.msra.mxu0 %v257
    %v259 = vand.u32 %v114, 4294901760
    %260 = vmatmul.f32.gmra.mxu0 %v259
    %v261 = vpop.f32.mrf.mxu0
    %v262 = vadd.f32 %v161, %v261
    %263 = vdwg.mxu0
    %v264 = vand.u32 %v62, 4294901760
    %v265 = vsub.f32 %v62, %v264
    %266 = vmatpush.msra.mxu0 %v265
    %v267 = vand.u32 %v61, 4294901760
    %v268 = vsub.f32 %v61, %v267
    %269 = vmatpush.msra.mxu0 %v268
    %v270 = vand.u32 %v60, 4294901760
    %v271 = vsub.f32 %v60, %v270
    %272 = vmatpush.msra.mxu0 %v271
    %v273 = vand.u32 %v59, 4294901760
    %v274 = vsub.f32 %v59, %v273
    %275 = vmatpush.msra.mxu0 %v274
    %v276 = vand.u32 %v58, 4294901760
    %v277 = vsub.f32 %v58, %v276
    %278 = vmatpush.msra.mxu0 %v277
    %v279 = vand.u32 %v57, 4294901760
    %v280 = vsub.f32 %v57, %v279
    %281 = vmatpush.msra.mxu0 %v280
    %v282 = vand.u32 %v56, 4294901760
    %v283 = vsub.f32 %v56, %v282
    %284 = vmatpush.msra.mxu0 %v283
    %v285 = vand.u32 %v55, 4294901760
    %v286 = vsub.f32 %v55, %v285
    %287 = vmatpush.msra.mxu0 %v286
    %v288 = vand.u32 %v54, 4294901760
    %v289 = vsub.f32 %v54, %v288
    %290 = vmatpush.msra.mxu0 %v289
    %v291 = vand.u32 %v53, 4294901760
    %v292 = vsub.f32 %v53, %v291
    %293 = vmatpush.msra.mxu0 %v292
    %v294 = vand.u32 %v52, 4294901760
    %v295 = vsub.f32 %v52, %v294
    %296 = vmatpush.msra.mxu0 %v295
    %v297 = vand.u32 %v51, 4294901760
    %v298 = vsub.f32 %v51, %v297
    %299 = vmatpush.msra.mxu0 %v298
    %v300 = vand.u32 %v50, 4294901760
    %v301 = vsub.f32 %v50, %v300
    %302 = vmatpush.msra.mxu0 %v301
    %v303 = vand.u32 %v49, 4294901760
    %v304 = vsub.f32 %v49, %v303
    %305 = vmatpush.msra.mxu0 %v304
    %v306 = vand.u32 %v48, 4294901760
    %v307 = vsub.f32 %v48, %v306
    %308 = vmatpush.msra.mxu0 %v307
    %v309 = vand.u32 %v47, 4294901760
    %v310 = vsub.f32 %v47, %v309
    %311 = vmatpush.msra.mxu0 %v310
    %v312 = vand.u32 %v114, 4294901760
    %v313 = vsub.f32 %v114, %v312
    %314 = vmatmul.f32.gmra.mxu0 %v313
    %v315 = vpop.f32.mrf.mxu0
    %v316 = vadd.f32 %v262, %v315
    %317 = vdwg.mxu0
    %v318 = vand.u32 %v62, 4294901760
    %319 = vmatpush.msra.mxu0 %v318
    %v320 = vand.u32 %v61, 4294901760
    %321 = vmatpush.msra.mxu0 %v320
    %v322 = vand.u32 %v60, 4294901760
    %323 = vmatpush.msra.mxu0 %v322
    %v324 = vand.u32 %v59, 4294901760
    %325 = vmatpush.msra.mxu0 %v324
    %v326 = vand.u32 %v58, 4294901760
    %327 = vmatpush.msra.mxu0 %v326
    %v328 = vand.u32 %v57, 4294901760
    %329 = vmatpush.msra.mxu0 %v328
    %v330 = vand.u32 %v56, 4294901760
    %331 = vmatpush.msra.mxu0 %v330
    %v332 = vand.u32 %v55, 4294901760
    %333 = vmatpush.msra.mxu0 %v332
    %v334 = vand.u32 %v54, 4294901760
    %335 = vmatpush.msra.mxu0 %v334
    %v336 = vand.u32 %v53, 4294901760
    %337 = vmatpush.msra.mxu0 %v336
    %v338 = vand.u32 %v52, 4294901760
    %339 = vmatpush.msra.mxu0 %v338
    %v340 = vand.u32 %v51, 4294901760
    %341 = vmatpush.msra.mxu0 %v340
    %v342 = vand.u32 %v50, 4294901760
    %343 = vmatpush.msra.mxu0 %v342
    %v344 = vand.u32 %v49, 4294901760
    %345 = vmatpush.msra.mxu0 %v344
    %v346 = vand.u32 %v48, 4294901760
    %347 = vmatpush.msra.mxu0 %v346
    %v348 = vand.u32 %v47, 4294901760
    %349 = vmatpush.msra.mxu0 %v348
    %v350 = vand.u32 %v114, 4294901760
    %v351 = vsub.f32 %v114, %v350
    %v352 = vand.u32 %v351, 4294901760
    %353 = vmatmul.f32.gmra.mxu0 %v352
    %v354 = vpop.f32.mrf.mxu0
    %v355 = vadd.f32 %v316, %v354
    %356 = vdwg.mxu0
    %v357 = vand.u32 %v62, 4294901760
    %v358 = vsub.f32 %v62, %v357
    %v359 = vand.u32 %v358, 4294901760
    %360 = vmatpush.msra.mxu0 %v359
    %v361 = vand.u32 %v61, 4294901760
    %v362 = vsub.f32 %v61, %v361
    %v363 = vand.u32 %v362, 4294901760
    %364 = vmatpush.msra.mxu0 %v363
    %v365 = vand.u32 %v60, 4294901760
    %v366 = vsub.f32 %v60, %v365
    %v367 = vand.u32 %v366, 4294901760
    %368 = vmatpush.msra.mxu0 %v367
    %v369 = vand.u32 %v59, 4294901760
    %v370 = vsub.f32 %v59, %v369
    %v371 = vand.u32 %v370, 4294901760
    %372 = vmatpush.msra.mxu0 %v371
    %v373 = vand.u32 %v58, 4294901760
    %v374 = vsub.f32 %v58, %v373
    %v375 = vand.u32 %v374, 4294901760
    %376 = vmatpush.msra.mxu0 %v375
    %v377 = vand.u32 %v57, 4294901760
    %v378 = vsub.f32 %v57, %v377
    %v379 = vand.u32 %v378, 4294901760
    %380 = vmatpush.msra.mxu0 %v379
    %v381 = vand.u32 %v56, 4294901760
    %v382 = vsub.f32 %v56, %v381
    %v383 = vand.u32 %v382, 4294901760
    %384 = vmatpush.msra.mxu0 %v383
    %v385 = vand.u32 %v55, 4294901760
    %v386 = vsub.f32 %v55, %v385
    %v387 = vand.u32 %v386, 4294901760
    %388 = vmatpush.msra.mxu0 %v387
    %v389 = vand.u32 %v54, 4294901760
    %v390 = vsub.f32 %v54, %v389
    %v391 = vand.u32 %v390, 4294901760
    %392 = vmatpush.msra.mxu0 %v391
    %v393 = vand.u32 %v53, 4294901760
    %v394 = vsub.f32 %v53, %v393
    %v395 = vand.u32 %v394, 4294901760
    %396 = vmatpush.msra.mxu0 %v395
    %v397 = vand.u32 %v52, 4294901760
    %v398 = vsub.f32 %v52, %v397
    %v399 = vand.u32 %v398, 4294901760
    %400 = vmatpush.msra.mxu0 %v399
    %v401 = vand.u32 %v51, 4294901760
    %v402 = vsub.f32 %v51, %v401
    %v403 = vand.u32 %v402, 4294901760
    %404 = vmatpush.msra.mxu0 %v403
    %v405 = vand.u32 %v50, 4294901760
    %v406 = vsub.f32 %v50, %v405
    %v407 = vand.u32 %v406, 4294901760
    %408 = vmatpush.msra.mxu0 %v407
    %v409 = vand.u32 %v49, 4294901760
    %v410 = vsub.f32 %v49, %v409
    %v411 = vand.u32 %v410, 4294901760
    %412 = vmatpush.msra.mxu0 %v411
    %v413 = vand.u32 %v48, 4294901760
    %v414 = vsub.f32 %v48, %v413
    %v415 = vand.u32 %v414, 4294901760
    %416 = vmatpush.msra.mxu0 %v415
    %v417 = vand.u32 %v47, 4294901760
    %v418 = vsub.f32 %v47, %v417
    %v419 = vand.u32 %v418, 4294901760
    %420 = vmatpush.msra.mxu0 %v419
    %v421 = vand.u32 %v114, 4294901760
    %422 = vmatmul.f32.gmra.mxu0 %v421
    %v423 = vpop.f32.mrf.mxu0
    %v424 = vadd.f32 %v355, %v423
    %425 = vdwg.mxu0
    %v426 = vand.u32 %v62, 4294901760
    %427 = vmatpush.msra.mxu0 %v426
    %v428 = vand.u32 %v61, 4294901760
    %429 = vmatpush.msra.mxu0 %v428
    %v430 = vand.u32 %v60, 4294901760
    %431 = vmatpush.msra.mxu0 %v430
    %v432 = vand.u32 %v59, 4294901760
    %433 = vmatpush.msra.mxu0 %v432
    %v434 = vand.u32 %v58, 4294901760
    %435 = vmatpush.msra.mxu0 %v434
    %v436 = vand.u32 %v57, 4294901760
    %437 = vmatpush.msra.mxu0 %v436
    %v438 = vand.u32 %v56, 4294901760
    %439 = vmatpush.msra.mxu0 %v438
    %v440 = vand.u32 %v55, 4294901760
    %441 = vmatpush.msra.mxu0 %v440
    %v442 = vand.u32 %v54, 4294901760
    %443 = vmatpush.msra.mxu0 %v442
    %v444 = vand.u32 %v53, 4294901760
    %445 = vmatpush.msra.mxu0 %v444
    %v446 = vand.u32 %v52, 4294901760
    %447 = vmatpush.msra.mxu0 %v446
    %v448 = vand.u32 %v51, 4294901760
    %449 = vmatpush.msra.mxu0 %v448
    %v450 = vand.u32 %v50, 4294901760
    %451 = vmatpush.msra.mxu0 %v450
    %v452 = vand.u32 %v49, 4294901760
    %453 = vmatpush.msra.mxu0 %v452
    %v454 = vand.u32 %v48, 4294901760
    %455 = vmatpush.msra.mxu0 %v454
    %v456 = vand.u32 %v47, 4294901760
    %457 = vmatpush.msra.mxu0 %v456
    %v458 = vand.u32 %v114, 4294901760
    %459 = vmatmul.f32.gmra.mxu0 %v458
    %v460 = vpop.f32.mrf.mxu0
    %v461 = vadd.f32 %v424, %v460
    %462 = vdwg.mxu0
    %v463 = vand.u32 %v78, 4294901760
    %464 = vmatpush.msra.mxu0 %v463
    %v465 = vand.u32 %v77, 4294901760
    %466 = vmatpush.msra.mxu0 %v465
    %v467 = vand.u32 %v76, 4294901760
    %468 = vmatpush.msra.mxu0 %v467
    %v469 = vand.u32 %v75, 4294901760
    %470 = vmatpush.msra.mxu0 %v469
    %v471 = vand.u32 %v74, 4294901760
    %472 = vmatpush.msra.mxu0 %v471
    %v473 = vand.u32 %v73, 4294901760
    %474 = vmatpush.msra.mxu0 %v473
    %v475 = vand.u32 %v72, 4294901760
    %476 = vmatpush.msra.mxu0 %v475
    %v477 = vand.u32 %v71, 4294901760
    %478 = vmatpush.msra.mxu0 %v477
    %v479 = vand.u32 %v70, 4294901760
    %480 = vmatpush.msra.mxu0 %v479
    %v481 = vand.u32 %v69, 4294901760
    %482 = vmatpush.msra.mxu0 %v481
    %v483 = vand.u32 %v68, 4294901760
    %484 = vmatpush.msra.mxu0 %v483
    %v485 = vand.u32 %v67, 4294901760
    %486 = vmatpush.msra.mxu0 %v485
    %v487 = vand.u32 %v66, 4294901760
    %488 = vmatpush.msra.mxu0 %v487
    %v489 = vand.u32 %v65, 4294901760
    %490 = vmatpush.msra.mxu0 %v489
    %v491 = vand.u32 %v64, 4294901760
    %492 = vmatpush.msra.mxu0 %v491
    %v493 = vand.u32 %v63, 4294901760
    %494 = vmatpush.msra.mxu0 %v493
    %v495 = vand.u32 %v115, 4294901760
    %v496 = vsub.f32 %v115, %v495
    %v497 = vand.u32 %v496, 4294901760
    %v498 = vsub.f32 %v496, %v497
    %v499 = vand.u32 %v498, 4294901760
    %500 = vmatmul.f32.gmra.mxu0 %v499
    %v501 = vpop.f32.mrf.mxu0
    %v502 = vadd.f32 %v461, %v501
    %503 = vdwg.mxu0
    %v504 = vand.u32 %v78, 4294901760
    %v505 = vsub.f32 %v78, %v504
    %v506 = vand.u32 %v505, 4294901760
    %v507 = vsub.f32 %v505, %v506
    %v508 = vand.u32 %v507, 4294901760
    %509 = vmatpush.msra.mxu0 %v508
    %v510 = vand.u32 %v77, 4294901760
    %v511 = vsub.f32 %v77, %v510
    %v512 = vand.u32 %v511, 4294901760
    %v513 = vsub.f32 %v511, %v512
    %v514 = vand.u32 %v513, 4294901760
    %515 = vmatpush.msra.mxu0 %v514
    %v516 = vand.u32 %v76, 4294901760
    %v517 = vsub.f32 %v76, %v516
    %v518 = vand.u32 %v517, 4294901760
    %v519 = vsub.f32 %v517, %v518
    %v520 = vand.u32 %v519, 4294901760
    %521 = vmatpush.msra.mxu0 %v520
    %v522 = vand.u32 %v75, 4294901760
    %v523 = vsub.f32 %v75, %v522
    %v524 = vand.u32 %v523, 4294901760
    %v525 = vsub.f32 %v523, %v524
    %v526 = vand.u32 %v525, 4294901760
    %527 = vmatpush.msra.mxu0 %v526
    %v528 = vand.u32 %v74, 4294901760
    %v529 = vsub.f32 %v74, %v528
    %v530 = vand.u32 %v529, 4294901760
    %v531 = vsub.f32 %v529, %v530
    %v532 = vand.u32 %v531, 4294901760
    %533 = vmatpush.msra.mxu0 %v532
    %v534 = vand.u32 %v73, 4294901760
    %v535 = vsub.f32 %v73, %v534
    %v536 = vand.u32 %v535, 4294901760
    %v537 = vsub.f32 %v535, %v536
    %v538 = vand.u32 %v537, 4294901760
    %539 = vmatpush.msra.mxu0 %v538
    %v540 = vand.u32 %v72, 4294901760
    %v541 = vsub.f32 %v72, %v540
    %v542 = vand.u32 %v541, 4294901760
    %v543 = vsub.f32 %v541, %v542
    %v544 = vand.u32 %v543, 4294901760
    %545 = vmatpush.msra.mxu0 %v544
    %v546 = vand.u32 %v71, 4294901760
    %v547 = vsub.f32 %v71, %v546
    %v548 = vand.u32 %v547, 4294901760
    %v549 = vsub.f32 %v547, %v548
    %v550 = vand.u32 %v549, 4294901760
    %551 = vmatpush.msra.mxu0 %v550
    %v552 = vand.u32 %v70, 4294901760
    %v553 = vsub.f32 %v70, %v552
    %v554 = vand.u32 %v553, 4294901760
    %v555 = vsub.f32 %v553, %v554
    %v556 = vand.u32 %v555, 4294901760
    %557 = vmatpush.msra.mxu0 %v556
    %v558 = vand.u32 %v69, 4294901760
    %v559 = vsub.f32 %v69, %v558
    %v560 = vand.u32 %v559, 4294901760
    %v561 = vsub.f32 %v559, %v560
    %v562 = vand.u32 %v561, 4294901760
    %563 = vmatpush.msra.mxu0 %v562
    %v564 = vand.u32 %v68, 4294901760
    %v565 = vsub.f32 %v68, %v564
    %v566 = vand.u32 %v565, 4294901760
    %v567 = vsub.f32 %v565, %v566
    %v568 = vand.u32 %v567, 4294901760
    %569 = vmatpush.msra.mxu0 %v568
    %v570 = vand.u32 %v67, 4294901760
    %v571 = vsub.f32 %v67, %v570
    %v572 = vand.u32 %v571, 4294901760
    %v573 = vsub.f32 %v571, %v572
    %v574 = vand.u32 %v573, 4294901760
    %575 = vmatpush.msra.mxu0 %v574
    %v576 = vand.u32 %v66, 4294901760
    %v577 = vsub.f32 %v66, %v576
    %v578 = vand.u32 %v577, 4294901760
    %v579 = vsub.f32 %v577, %v578
    %v580 = vand.u32 %v579, 4294901760
    %581 = vmatpush.msra.mxu0 %v580
    %v582 = vand.u32 %v65, 4294901760
    %v583 = vsub.f32 %v65, %v582
    %v584 = vand.u32 %v583, 4294901760
    %v585 = vsub.f32 %v583, %v584
    %v586 = vand.u32 %v585, 4294901760
    %587 = vmatpush.msra.mxu0 %v586
    %v588 = vand.u32 %v64, 4294901760
    %v589 = vsub.f32 %v64, %v588
    %v590 = vand.u32 %v589, 4294901760
    %v591 = vsub.f32 %v589, %v590
    %v592 = vand.u32 %v591, 4294901760
    %593 = vmatpush.msra.mxu0 %v592
    %v594 = vand.u32 %v63, 4294901760
    %v595 = vsub.f32 %v63, %v594
    %v596 = vand.u32 %v595, 4294901760
    %v597 = vsub.f32 %v595, %v596
    %v598 = vand.u32 %v597, 4294901760
    %599 = vmatpush.msra.mxu0 %v598
    %v600 = vand.u32 %v115, 4294901760
    %601 = vmatmul.f32.gmra.mxu0 %v600
    %v602 = vpop.f32.mrf.mxu0
    %v603 = vadd.f32 %v502, %v602
    %604 = vdwg.mxu0
    %v605 = vand.u32 %v78, 4294901760
    %v606 = vsub.f32 %v78, %v605
    %607 = vmatpush.msra.mxu0 %v606
    %v608 = vand.u32 %v77, 4294901760
    %v609 = vsub.f32 %v77, %v608
    %610 = vmatpush.msra.mxu0 %v609
    %v611 = vand.u32 %v76, 4294901760
    %v612 = vsub.f32 %v76, %v611
    %613 = vmatpush.msra.mxu0 %v612
    %v614 = vand.u32 %v75, 4294901760
    %v615 = vsub.f32 %v75, %v614
    %616 = vmatpush.msra.mxu0 %v615
    %v617 = vand.u32 %v74, 4294901760
    %v618 = vsub.f32 %v74, %v617
    %619 = vmatpush.msra.mxu0 %v618
    %v620 = vand.u32 %v73, 4294901760
    %v621 = vsub.f32 %v73, %v620
    %622 = vmatpush.msra.mxu0 %v621
    %v623 = vand.u32 %v72, 4294901760
    %v624 = vsub.f32 %v72, %v623
    %625 = vmatpush.msra.mxu0 %v624
    %v626 = vand.u32 %v71, 4294901760
    %v627 = vsub.f32 %v71, %v626
    %628 = vmatpush.msra.mxu0 %v627
    %v629 = vand.u32 %v70, 4294901760
    %v630 = vsub.f32 %v70, %v629
    %631 = vmatpush.msra.mxu0 %v630
    %v632 = vand.u32 %v69, 4294901760
    %v633 = vsub.f32 %v69, %v632
    %634 = vmatpush.msra.mxu0 %v633
    %v635 = vand.u32 %v68, 4294901760
    %v636 = vsub.f32 %v68, %v635
    %637 = vmatpush.msra.mxu0 %v636
    %v638 = vand.u32 %v67, 4294901760
    %v639 = vsub.f32 %v67, %v638
    %640 = vmatpush.msra.mxu0 %v639
    %v641 = vand.u32 %v66, 4294901760
    %v642 = vsub.f32 %v66, %v641
    %643 = vmatpush.msra.mxu0 %v642
    %v644 = vand.u32 %v65, 4294901760
    %v645 = vsub.f32 %v65, %v644
    %646 = vmatpush.msra.mxu0 %v645
    %v647 = vand.u32 %v64, 4294901760
    %v648 = vsub.f32 %v64, %v647
    %649 = vmatpush.msra.mxu0 %v648
    %v650 = vand.u32 %v63, 4294901760
    %v651 = vsub.f32 %v63, %v650
    %652 = vmatpush.msra.mxu0 %v651
    %v653 = vand.u32 %v115, 4294901760
    %v654 = vsub.f32 %v115, %v653
    %655 = vmatmul.f32.gmra.mxu0 %v654
    %v656 = vpop.f32.mrf.mxu0
    %v657 = vadd.f32 %v603, %v656
    %658 = vdwg.mxu0
    %v659 = vand.u32 %v78, 4294901760
    %660 = vmatpush.msra.mxu0 %v659
    %v661 = vand.u32 %v77, 4294901760
    %662 = vmatpush.msra.mxu0 %v661
    %v663 = vand.u32 %v76, 4294901760
    %664 = vmatpush.msra.mxu0 %v663
    %v665 = vand.u32 %v75, 4294901760
    %666 = vmatpush.msra.mxu0 %v665
    %v667 = vand.u32 %v74, 4294901760
    %668 = vmatpush.msra.mxu0 %v667
    %v669 = vand.u32 %v73, 4294901760
    %670 = vmatpush.msra.mxu0 %v669
    %v671 = vand.u32 %v72, 4294901760
    %672 = vmatpush.msra.mxu0 %v671
    %v673 = vand.u32 %v71, 4294901760
    %674 = vmatpush.msra.mxu0 %v673
    %v675 = vand.u32 %v70, 4294901760
    %676 = vmatpush.msra.mxu0 %v675
    %v677 = vand.u32 %v69, 4294901760
    %678 = vmatpush.msra.mxu0 %v677
    %v679 = vand.u32 %v68, 4294901760
    %680 = vmatpush.msra.mxu0 %v679
    %v681 = vand.u32 %v67, 4294901760
    %682 = vmatpush.msra.mxu0 %v681
    %v683 = vand.u32 %v66, 4294901760
    %684 = vmatpush.msra.mxu0 %v683
    %v685 = vand.u32 %v65, 4294901760
    %686 = vmatpush.msra.mxu0 %v685
    %v687 = vand.u32 %v64, 4294901760
    %688 = vmatpush.msra.mxu0 %v687
    %v689 = vand.u32 %v63, 4294901760
    %690 = vmatpush.msra.mxu0 %v689
    %v691 = vand.u32 %v115, 4294901760
    %v692 = vsub.f32 %v115, %v691
    %v693 = vand.u32 %v692, 4294901760
    %694 = vmatmul.f32.gmra.mxu0 %v693
    %v695 = vpop.f32.mrf.mxu0
    %v696 = vadd.f32 %v657, %v695
    %697 = vdwg.mxu0
    %v698 = vand.u32 %v78, 4294901760
    %v699 = vsub.f32 %v78, %v698
    %v700 = vand.u32 %v699, 4294901760
    %701 = vmatpush.msra.mxu0 %v700
    %v702 = vand.u32 %v77, 4294901760
    %v703 = vsub.f32 %v77, %v702
    %v704 = vand.u32 %v703, 4294901760
    %705 = vmatpush.msra.mxu0 %v704
    %v706 = vand.u32 %v76, 4294901760
    %v707 = vsub.f32 %v76, %v706
    %v708 = vand.u32 %v707, 4294901760
    %709 = vmatpush.msra.mxu0 %v708
    %v710 = vand.u32 %v75, 4294901760
    %v711 = vsub.f32 %v75, %v710
    %v712 = vand.u32 %v711, 4294901760
    %713 = vmatpush.msra.mxu0 %v712
    %v714 = vand.u32 %v74, 4294901760
    %v715 = vsub.f32 %v74, %v714
    %v716 = vand.u32 %v715, 4294901760
    %717 = vmatpush.msra.mxu0 %v716
    %v718 = vand.u32 %v73, 4294901760
    %v719 = vsub.f32 %v73, %v718
    %v720 = vand.u32 %v719, 4294901760
    %721 = vmatpush.msra.mxu0 %v720
    %v722 = vand.u32 %v72, 4294901760
    %v723 = vsub.f32 %v72, %v722
    %v724 = vand.u32 %v723, 4294901760
    %725 = vmatpush.msra.mxu0 %v724
    %v726 = vand.u32 %v71, 4294901760
    %v727 = vsub.f32 %v71, %v726
    %v728 = vand.u32 %v727, 4294901760
    %729 = vmatpush.msra.mxu0 %v728
    %v730 = vand.u32 %v70, 4294901760
    %v731 = vsub.f32 %v70, %v730
    %v732 = vand.u32 %v731, 4294901760
    %733 = vmatpush.msra.mxu0 %v732
    %v734 = vand.u32 %v69, 4294901760
    %v735 = vsub.f32 %v69, %v734
    %v736 = vand.u32 %v735, 4294901760
    %737 = vmatpush.msra.mxu0 %v736
    %v738 = vand.u32 %v68, 4294901760
    %v739 = vsub.f32 %v68, %v738
    %v740 = vand.u32 %v739, 4294901760
    %741 = vmatpush.msra.mxu0 %v740
    %v742 = vand.u32 %v67, 4294901760
    %v743 = vsub.f32 %v67, %v742
    %v744 = vand.u32 %v743, 4294901760
    %745 = vmatpush.msra.mxu0 %v744
    %v746 = vand.u32 %v66, 4294901760
    %v747 = vsub.f32 %v66, %v746
    %v748 = vand.u32 %v747, 4294901760
    %749 = vmatpush.msra.mxu0 %v748
    %v750 = vand.u32 %v65, 4294901760
    %v751 = vsub.f32 %v65, %v750
    %v752 = vand.u32 %v751, 4294901760
    %753 = vmatpush.msra.mxu0 %v752
    %v754 = vand.u32 %v64, 4294901760
    %v755 = vsub.f32 %v64, %v754
    %v756 = vand.u32 %v755, 4294901760
    %757 = vmatpush.msra.mxu0 %v756
    %v758 = vand.u32 %v63, 4294901760
    %v759 = vsub.f32 %v63, %v758
    %v760 = vand.u32 %v759, 4294901760
    %761 = vmatpush.msra.mxu0 %v760
    %v762 = vand.u32 %v115, 4294901760
    %763 = vmatmul.f32.gmra.mxu0 %v762
    %v764 = vpop.f32.mrf.mxu0
    %v765 = vadd.f32 %v696, %v764
    %766 = vdwg.mxu0
    %v767 = vand.u32 %v78, 4294901760
    %768 = vmatpush.msra.mxu0 %v767
    %v769 = vand.u32 %v77, 4294901760
    %770 = vmatpush.msra.mxu0 %v769
    %v771 = vand.u32 %v76, 4294901760
    %772 = vmatpush.msra.mxu0 %v771
    %v773 = vand.u32 %v75, 4294901760
    %774 = vmatpush.msra.mxu0 %v773
    %v775 = vand.u32 %v74, 4294901760
    %776 = vmatpush.msra.mxu0 %v775
    %v777 = vand.u32 %v73, 4294901760
    %778 = vmatpush.msra.mxu0 %v777
    %v779 = vand.u32 %v72, 4294901760
    %780 = vmatpush.msra.mxu0 %v779
    %v781 = vand.u32 %v71, 4294901760
    %782 = vmatpush.msra.mxu0 %v781
    %v783 = vand.u32 %v70, 4294901760
    %784 = vmatpush.msra.mxu0 %v783
    %v785 = vand.u32 %v69, 4294901760
    %786 = vmatpush.msra.mxu0 %v785
    %v787 = vand.u32 %v68, 4294901760
    %788 = vmatpush.msra.mxu0 %v787
    %v789 = vand.u32 %v67, 4294901760
    %790 = vmatpush.msra.mxu0 %v789
    %v791 = vand.u32 %v66, 4294901760
    %792 = vmatpush.msra.mxu0 %v791
    %v793 = vand.u32 %v65, 4294901760
    %794 = vmatpush.msra.mxu0 %v793
    %v795 = vand.u32 %v64, 4294901760
    %796 = vmatpush.msra.mxu0 %v795
    %v797 = vand.u32 %v63, 4294901760
    %798 = vmatpush.msra.mxu0 %v797
    %v799 = vand.u32 %v115, 4294901760
    %800 = vmatmul.f32.gmra.mxu0 %v799
    %v801 = vpop.f32.mrf.mxu0
    %v802 = vadd.f32 %v765, %v801
    %803 = vdwg.mxu0
    %v804 = vand.u32 %v94, 4294901760
    %805 = vmatpush.msra.mxu0 %v804
    %v806 = vand.u32 %v93, 4294901760
    %807 = vmatpush.msra.mxu0 %v806
    %v808 = vand.u32 %v92, 4294901760
    %809 = vmatpush.msra.mxu0 %v808
    %v810 = vand.u32 %v91, 4294901760
    %811 = vmatpush.msra.mxu0 %v810
    %v812 = vand.u32 %v90, 4294901760
    %813 = vmatpush.msra.mxu0 %v812
    %v814 = vand.u32 %v89, 4294901760
    %815 = vmatpush.msra.mxu0 %v814
    %v816 = vand.u32 %v88, 4294901760
    %817 = vmatpush.msra.mxu0 %v816
    %v818 = vand.u32 %v87, 4294901760
    %819 = vmatpush.msra.mxu0 %v818
    %v820 = vand.u32 %v86, 4294901760
    %821 = vmatpush.msra.mxu0 %v820
    %v822 = vand.u32 %v85, 4294901760
    %823 = vmatpush.msra.mxu0 %v822
    %v824 = vand.u32 %v84, 4294901760
    %825 = vmatpush.msra.mxu0 %v824
    %v826 = vand.u32 %v83, 4294901760
    %827 = vmatpush.msra.mxu0 %v826
    %v828 = vand.u32 %v82, 4294901760
    %829 = vmatpush.msra.mxu0 %v828
    %v830 = vand.u32 %v81, 4294901760
    %831 = vmatpush.msra.mxu0 %v830
    %v832 = vand.u32 %v80, 4294901760
    %833 = vmatpush.msra.mxu0 %v832
    %v834 = vand.u32 %v79, 4294901760
    %835 = vmatpush.msra.mxu0 %v834
    %v836 = vand.u32 %v116, 4294901760
    %v837 = vsub.f32 %v116, %v836
    %v838 = vand.u32 %v837, 4294901760
    %v839 = vsub.f32 %v837, %v838
    %v840 = vand.u32 %v839, 4294901760
    %841 = vmatmul.f32.gmra.mxu0 %v840
    %v842 = vpop.f32.mrf.mxu0
    %v843 = vadd.f32 %v802, %v842
    %844 = vdwg.mxu0
    %v845 = vand.u32 %v94, 4294901760
    %v846 = vsub.f32 %v94, %v845
    %v847 = vand.u32 %v846, 4294901760
    %v848 = vsub.f32 %v846, %v847
    %v849 = vand.u32 %v848, 4294901760
    %850 = vmatpush.msra.mxu0 %v849
    %v851 = vand.u32 %v93, 4294901760
    %v852 = vsub.f32 %v93, %v851
    %v853 = vand.u32 %v852, 4294901760
    %v854 = vsub.f32 %v852, %v853
    %v855 = vand.u32 %v854, 4294901760
    %856 = vmatpush.msra.mxu0 %v855
    %v857 = vand.u32 %v92, 4294901760
    %v858 = vsub.f32 %v92, %v857
    %v859 = vand.u32 %v858, 4294901760
    %v860 = vsub.f32 %v858, %v859
    %v861 = vand.u32 %v860, 4294901760
    %862 = vmatpush.msra.mxu0 %v861
    %v863 = vand.u32 %v91, 4294901760
    %v864 = vsub.f32 %v91, %v863
    %v865 = vand.u32 %v864, 4294901760
    %v866 = vsub.f32 %v864, %v865
    %v867 = vand.u32 %v866, 4294901760
    %868 = vmatpush.msra.mxu0 %v867
    %v869 = vand.u32 %v90, 4294901760
    %v870 = vsub.f32 %v90, %v869
    %v871 = vand.u32 %v870, 4294901760
    %v872 = vsub.f32 %v870, %v871
    %v873 = vand.u32 %v872, 4294901760
    %874 = vmatpush.msra.mxu0 %v873
    %v875 = vand.u32 %v89, 4294901760
    %v876 = vsub.f32 %v89, %v875
    %v877 = vand.u32 %v876, 4294901760
    %v878 = vsub.f32 %v876, %v877
    %v879 = vand.u32 %v878, 4294901760
    %880 = vmatpush.msra.mxu0 %v879
    %v881 = vand.u32 %v88, 4294901760
    %v882 = vsub.f32 %v88, %v881
    %v883 = vand.u32 %v882, 4294901760
    %v884 = vsub.f32 %v882, %v883
    %v885 = vand.u32 %v884, 4294901760
    %886 = vmatpush.msra.mxu0 %v885
    %v887 = vand.u32 %v87, 4294901760
    %v888 = vsub.f32 %v87, %v887
    %v889 = vand.u32 %v888, 4294901760
    %v890 = vsub.f32 %v888, %v889
    %v891 = vand.u32 %v890, 4294901760
    %892 = vmatpush.msra.mxu0 %v891
    %v893 = vand.u32 %v86, 4294901760
    %v894 = vsub.f32 %v86, %v893
    %v895 = vand.u32 %v894, 4294901760
    %v896 = vsub.f32 %v894, %v895
    %v897 = vand.u32 %v896, 4294901760
    %898 = vmatpush.msra.mxu0 %v897
    %v899 = vand.u32 %v85, 4294901760
    %v900 = vsub.f32 %v85, %v899
    %v901 = vand.u32 %v900, 4294901760
    %v902 = vsub.f32 %v900, %v901
    %v903 = vand.u32 %v902, 4294901760
    %904 = vmatpush.msra.mxu0 %v903
    %v905 = vand.u32 %v84, 4294901760
    %v906 = vsub.f32 %v84, %v905
    %v907 = vand.u32 %v906, 4294901760
    %v908 = vsub.f32 %v906, %v907
    %v909 = vand.u32 %v908, 4294901760
    %910 = vmatpush.msra.mxu0 %v909
    %v911 = vand.u32 %v83, 4294901760
    %v912 = vsub.f32 %v83, %v911
    %v913 = vand.u32 %v912, 4294901760
    %v914 = vsub.f32 %v912, %v913
    %v915 = vand.u32 %v914, 4294901760
    %916 = vmatpush.msra.mxu0 %v915
    %v917 = vand.u32 %v82, 4294901760
    %v918 = vsub.f32 %v82, %v917
    %v919 = vand.u32 %v918, 4294901760
    %v920 = vsub.f32 %v918, %v919
    %v921 = vand.u32 %v920, 4294901760
    %922 = vmatpush.msra.mxu0 %v921
    %v923 = vand.u32 %v81, 4294901760
    %v924 = vsub.f32 %v81, %v923
    %v925 = vand.u32 %v924, 4294901760
    %v926 = vsub.f32 %v924, %v925
    %v927 = vand.u32 %v926, 4294901760
    %928 = vmatpush.msra.mxu0 %v927
    %v929 = vand.u32 %v80, 4294901760
    %v930 = vsub.f32 %v80, %v929
    %v931 = vand.u32 %v930, 4294901760
    %v932 = vsub.f32 %v930, %v931
    %v933 = vand.u32 %v932, 4294901760
    %934 = vmatpush.msra.mxu0 %v933
    %v935 = vand.u32 %v79, 4294901760
    %v936 = vsub.f32 %v79, %v935
    %v937 = vand.u32 %v936, 4294901760
    %v938 = vsub.f32 %v936, %v937
    %v939 = vand.u32 %v938, 4294901760
    %940 = vmatpush.msra.mxu0 %v939
    %v941 = vand.u32 %v116, 4294901760
    %942 = vmatmul.f32.gmra.mxu0 %v941
    %v943 = vpop.f32.mrf.mxu0
    %v944 = vadd.f32 %v843, %v943
    %945 = vdwg.mxu0
    %v946 = vand.u32 %v94, 4294901760
    %v947 = vsub.f32 %v94, %v946
    %948 = vmatpush.msra.mxu0 %v947
    %v949 = vand.u32 %v93, 4294901760
    %v950 = vsub.f32 %v93, %v949
    %951 = vmatpush.msra.mxu0 %v950
    %v952 = vand.u32 %v92, 4294901760
    %v953 = vsub.f32 %v92, %v952
    %954 = vmatpush.msra.mxu0 %v953
    %v955 = vand.u32 %v91, 4294901760
    %v956 = vsub.f32 %v91, %v955
    %957 = vmatpush.msra.mxu0 %v956
    %v958 = vand.u32 %v90, 4294901760
    %v959 = vsub.f32 %v90, %v958
    %960 = vmatpush.msra.mxu0 %v959
    %v961 = vand.u32 %v89, 4294901760
    %v962 = vsub.f32 %v89, %v961
    %963 = vmatpush.msra.mxu0 %v962
    %v964 = vand.u32 %v88, 4294901760
    %v965 = vsub.f32 %v88, %v964
    %966 = vmatpush.msra.mxu0 %v965
    %v967 = vand.u32 %v87, 4294901760
    %v968 = vsub.f32 %v87, %v967
    %969 = vmatpush.msra.mxu0 %v968
    %v970 = vand.u32 %v86, 4294901760
    %v971 = vsub.f32 %v86, %v970
    %972 = vmatpush.msra.mxu0 %v971
    %v973 = vand.u32 %v85, 4294901760
    %v974 = vsub.f32 %v85, %v973
    %975 = vmatpush.msra.mxu0 %v974
    %v976 = vand.u32 %v84, 4294901760
    %v977 = vsub.f32 %v84, %v976
    %978 = vmatpush.msra.mxu0 %v977
    %v979 = vand.u32 %v83, 4294901760
    %v980 = vsub.f32 %v83, %v979
    %981 = vmatpush.msra.mxu0 %v980
    %v982 = vand.u32 %v82, 4294901760
    %v983 = vsub.f32 %v82, %v982
    %984 = vmatpush.msra.mxu0 %v983
    %v985 = vand.u32 %v81, 4294901760
    %v986 = vsub.f32 %v81, %v985
    %987 = vmatpush.msra.mxu0 %v986
    %v988 = vand.u32 %v80, 4294901760
    %v989 = vsub.f32 %v80, %v988
    %990 = vmatpush.msra.mxu0 %v989
    %v991 = vand.u32 %v79, 4294901760
    %v992 = vsub.f32 %v79, %v991
    %993 = vmatpush.msra.mxu0 %v992
    %v994 = vand.u32 %v116, 4294901760
    %v995 = vsub.f32 %v116, %v994
    %996 = vmatmul.f32.gmra.mxu0 %v995
    %v997 = vpop.f32.mrf.mxu0
    %v998 = vadd.f32 %v944, %v997
    %999 = vdwg.mxu0
    %v1000 = vand.u32 %v94, 4294901760
    %1001 = vmatpush.msra.mxu0 %v1000
    %v1002 = vand.u32 %v93, 4294901760
    %1003 = vmatpush.msra.mxu0 %v1002
    %v1004 = vand.u32 %v92, 4294901760
    %1005 = vmatpush.msra.mxu0 %v1004
    %v1006 = vand.u32 %v91, 4294901760
    %1007 = vmatpush.msra.mxu0 %v1006
    %v1008 = vand.u32 %v90, 4294901760
    %1009 = vmatpush.msra.mxu0 %v1008
    %v1010 = vand.u32 %v89, 4294901760
    %1011 = vmatpush.msra.mxu0 %v1010
    %v1012 = vand.u32 %v88, 4294901760
    %1013 = vmatpush.msra.mxu0 %v1012
    %v1014 = vand.u32 %v87, 4294901760
    %1015 = vmatpush.msra.mxu0 %v1014
    %v1016 = vand.u32 %v86, 4294901760
    %1017 = vmatpush.msra.mxu0 %v1016
    %v1018 = vand.u32 %v85, 4294901760
    %1019 = vmatpush.msra.mxu0 %v1018
    %v1020 = vand.u32 %v84, 4294901760
    %1021 = vmatpush.msra.mxu0 %v1020
    %v1022 = vand.u32 %v83, 4294901760
    %1023 = vmatpush.msra.mxu0 %v1022
    %v1024 = vand.u32 %v82, 4294901760
    %1025 = vmatpush.msra.mxu0 %v1024
    %v1026 = vand.u32 %v81, 4294901760
    %1027 = vmatpush.msra.mxu0 %v1026
    %v1028 = vand.u32 %v80, 4294901760
    %1029 = vmatpush.msra.mxu0 %v1028
    %v1030 = vand.u32 %v79, 4294901760
    %1031 = vmatpush.msra.mxu0 %v1030
    %v1032 = vand.u32 %v116, 4294901760
    %v1033 = vsub.f32 %v116, %v1032
    %v1034 = vand.u32 %v1033, 4294901760
    %1035 = vmatmul.f32.gmra.mxu0 %v1034
    %v1036 = vpop.f32.mrf.mxu0
    %v1037 = vadd.f32 %v998, %v1036
    %1038 = vdwg.mxu0
    %v1039 = vand.u32 %v94, 4294901760
    %v1040 = vsub.f32 %v94, %v1039
    %v1041 = vand.u32 %v1040, 4294901760
    %1042 = vmatpush.msra.mxu0 %v1041
    %v1043 = vand.u32 %v93, 4294901760
    %v1044 = vsub.f32 %v93, %v1043
    %v1045 = vand.u32 %v1044, 4294901760
    %1046 = vmatpush.msra.mxu0 %v1045
    %v1047 = vand.u32 %v92, 4294901760
    %v1048 = vsub.f32 %v92, %v1047
    %v1049 = vand.u32 %v1048, 4294901760
    %1050 = vmatpush.msra.mxu0 %v1049
    %v1051 = vand.u32 %v91, 4294901760
    %v1052 = vsub.f32 %v91, %v1051
    %v1053 = vand.u32 %v1052, 4294901760
    %1054 = vmatpush.msra.mxu0 %v1053
    %v1055 = vand.u32 %v90, 4294901760
    %v1056 = vsub.f32 %v90, %v1055
    %v1057 = vand.u32 %v1056, 4294901760
    %1058 = vmatpush.msra.mxu0 %v1057
    %v1059 = vand.u32 %v89, 4294901760
    %v1060 = vsub.f32 %v89, %v1059
    %v1061 = vand.u32 %v1060, 4294901760
    %1062 = vmatpush.msra.mxu0 %v1061
    %v1063 = vand.u32 %v88, 4294901760
    %v1064 = vsub.f32 %v88, %v1063
    %v1065 = vand.u32 %v1064, 4294901760
    %1066 = vmatpush.msra.mxu0 %v1065
    %v1067 = vand.u32 %v87, 4294901760
    %v1068 = vsub.f32 %v87, %v1067
    %v1069 = vand.u32 %v1068, 4294901760
    %1070 = vmatpush.msra.mxu0 %v1069
    %v1071 = vand.u32 %v86, 4294901760
    %v1072 = vsub.f32 %v86, %v1071
    %v1073 = vand.u32 %v1072, 4294901760
    %1074 = vmatpush.msra.mxu0 %v1073
    %v1075 = vand.u32 %v85, 4294901760
    %v1076 = vsub.f32 %v85, %v1075
    %v1077 = vand.u32 %v1076, 4294901760
    %1078 = vmatpush.msra.mxu0 %v1077
    %v1079 = vand.u32 %v84, 4294901760
    %v1080 = vsub.f32 %v84, %v1079
    %v1081 = vand.u32 %v1080, 4294901760
    %1082 = vmatpush.msra.mxu0 %v1081
    %v1083 = vand.u32 %v83, 4294901760
    %v1084 = vsub.f32 %v83, %v1083
    %v1085 = vand.u32 %v1084, 4294901760
    %1086 = vmatpush.msra.mxu0 %v1085
    %v1087 = vand.u32 %v82, 4294901760
    %v1088 = vsub.f32 %v82, %v1087
    %v1089 = vand.u32 %v1088, 4294901760
    %1090 = vmatpush.msra.mxu0 %v1089
    %v1091 = vand.u32 %v81, 4294901760
    %v1092 = vsub.f32 %v81, %v1091
    %v1093 = vand.u32 %v1092, 4294901760
    %1094 = vmatpush.msra.mxu0 %v1093
    %v1095 = vand.u32 %v80, 4294901760
    %v1096 = vsub.f32 %v80, %v1095
    %v1097 = vand.u32 %v1096, 4294901760
    %1098 = vmatpush.msra.mxu0 %v1097
    %v1099 = vand.u32 %v79, 4294901760
    %v1100 = vsub.f32 %v79, %v1099
    %v1101 = vand.u32 %v1100, 4294901760
    %1102 = vmatpush.msra.mxu0 %v1101
    %v1103 = vand.u32 %v116, 4294901760
    %1104 = vmatmul.f32.gmra.mxu0 %v1103
    %v1105 = vpop.f32.mrf.mxu0
    %v1106 = vadd.f32 %v1037, %v1105
    %1107 = vdwg.mxu0
    %v1108 = vand.u32 %v94, 4294901760
    %1109 = vmatpush.msra.mxu0 %v1108
    %v1110 = vand.u32 %v93, 4294901760
    %1111 = vmatpush.msra.mxu0 %v1110
    %v1112 = vand.u32 %v92, 4294901760
    %1113 = vmatpush.msra.mxu0 %v1112
    %v1114 = vand.u32 %v91, 4294901760
    %1115 = vmatpush.msra.mxu0 %v1114
    %v1116 = vand.u32 %v90, 4294901760
    %1117 = vmatpush.msra.mxu0 %v1116
    %v1118 = vand.u32 %v89, 4294901760
    %1119 = vmatpush.msra.mxu0 %v1118
    %v1120 = vand.u32 %v88, 4294901760
    %1121 = vmatpush.msra.mxu0 %v1120
    %v1122 = vand.u32 %v87, 4294901760
    %1123 = vmatpush.msra.mxu0 %v1122
    %v1124 = vand.u32 %v86, 4294901760
    %1125 = vmatpush.msra.mxu0 %v1124
    %v1126 = vand.u32 %v85, 4294901760
    %1127 = vmatpush.msra.mxu0 %v1126
    %v1128 = vand.u32 %v84, 4294901760
    %1129 = vmatpush.msra.mxu0 %v1128
    %v1130 = vand.u32 %v83, 4294901760
    %1131 = vmatpush.msra.mxu0 %v1130
    %v1132 = vand.u32 %v82, 4294901760
    %1133 = vmatpush.msra.mxu0 %v1132
    %v1134 = vand.u32 %v81, 4294901760
    %1135 = vmatpush.msra.mxu0 %v1134
    %v1136 = vand.u32 %v80, 4294901760
    %1137 = vmatpush.msra.mxu0 %v1136
    %v1138 = vand.u32 %v79, 4294901760
    %1139 = vmatpush.msra.mxu0 %v1138
    %v1140 = vand.u32 %v116, 4294901760
    %1141 = vmatmul.f32.gmra.mxu0 %v1140
    %v1142 = vpop.f32.mrf.mxu0
    %v1143 = vadd.f32 %v1106, %v1142
    %1144 = vdwg.mxu0
    %v1145 = vand.u32 %v110, 4294901760
    %1146 = vmatpush.msra.mxu0 %v1145
    %v1147 = vand.u32 %v109, 4294901760
    %1148 = vmatpush.msra.mxu0 %v1147
    %v1149 = vand.u32 %v108, 4294901760
    %1150 = vmatpush.msra.mxu0 %v1149
    %v1151 = vand.u32 %v107, 4294901760
    %1152 = vmatpush.msra.mxu0 %v1151
    %v1153 = vand.u32 %v106, 4294901760
    %1154 = vmatpush.msra.mxu0 %v1153
    %v1155 = vand.u32 %v105, 4294901760
    %1156 = vmatpush.msra.mxu0 %v1155
    %v1157 = vand.u32 %v104, 4294901760
    %1158 = vmatpush.msra.mxu0 %v1157
    %v1159 = vand.u32 %v103, 4294901760
    %1160 = vmatpush.msra.mxu0 %v1159
    %v1161 = vand.u32 %v102, 4294901760
    %1162 = vmatpush.msra.mxu0 %v1161
    %v1163 = vand.u32 %v101, 4294901760
    %1164 = vmatpush.msra.mxu0 %v1163
    %v1165 = vand.u32 %v100, 4294901760
    %1166 = vmatpush.msra.mxu0 %v1165
    %v1167 = vand.u32 %v99, 4294901760
    %1168 = vmatpush.msra.mxu0 %v1167
    %v1169 = vand.u32 %v98, 4294901760
    %1170 = vmatpush.msra.mxu0 %v1169
    %v1171 = vand.u32 %v97, 4294901760
    %1172 = vmatpush.msra.mxu0 %v1171
    %v1173 = vand.u32 %v96, 4294901760
    %1174 = vmatpush.msra.mxu0 %v1173
    %v1175 = vand.u32 %v95, 4294901760
    %1176 = vmatpush.msra.mxu0 %v1175
    %v1177 = vand.u32 %v117, 4294901760
    %v1178 = vsub.f32 %v117, %v1177
    %v1179 = vand.u32 %v1178, 4294901760
    %v1180 = vsub.f32 %v1178, %v1179
    %v1181 = vand.u32 %v1180, 4294901760
    %1182 = vmatmul.f32.gmra.mxu0 %v1181
    %v1183 = vpop.f32.mrf.mxu0
    %v1184 = vadd.f32 %v1143, %v1183
    %1185 = vdwg.mxu0
    %v1186 = vand.u32 %v110, 4294901760
    %v1187 = vsub.f32 %v110, %v1186
    %v1188 = vand.u32 %v1187, 4294901760
    %v1189 = vsub.f32 %v1187, %v1188
    %v1190 = vand.u32 %v1189, 4294901760
    %1191 = vmatpush.msra.mxu0 %v1190
    %v1192 = vand.u32 %v109, 4294901760
    %v1193 = vsub.f32 %v109, %v1192
    %v1194 = vand.u32 %v1193, 4294901760
    %v1195 = vsub.f32 %v1193, %v1194
    %v1196 = vand.u32 %v1195, 4294901760
    %1197 = vmatpush.msra.mxu0 %v1196
    %v1198 = vand.u32 %v108, 4294901760
    %v1199 = vsub.f32 %v108, %v1198
    %v1200 = vand.u32 %v1199, 4294901760
    %v1201 = vsub.f32 %v1199, %v1200
    %v1202 = vand.u32 %v1201, 4294901760
    %1203 = vmatpush.msra.mxu0 %v1202
    %v1204 = vand.u32 %v107, 4294901760
    %v1205 = vsub.f32 %v107, %v1204
    %v1206 = vand.u32 %v1205, 4294901760
    %v1207 = vsub.f32 %v1205, %v1206
    %v1208 = vand.u32 %v1207, 4294901760
    %1209 = vmatpush.msra.mxu0 %v1208
    %v1210 = vand.u32 %v106, 4294901760
    %v1211 = vsub.f32 %v106, %v1210
    %v1212 = vand.u32 %v1211, 4294901760
    %v1213 = vsub.f32 %v1211, %v1212
    %v1214 = vand.u32 %v1213, 4294901760
    %1215 = vmatpush.msra.mxu0 %v1214
    %v1216 = vand.u32 %v105, 4294901760
    %v1217 = vsub.f32 %v105, %v1216
    %v1218 = vand.u32 %v1217, 4294901760
    %v1219 = vsub.f32 %v1217, %v1218
    %v1220 = vand.u32 %v1219, 4294901760
    %1221 = vmatpush.msra.mxu0 %v1220
    %v1222 = vand.u32 %v104, 4294901760
    %v1223 = vsub.f32 %v104, %v1222
    %v1224 = vand.u32 %v1223, 4294901760
    %v1225 = vsub.f32 %v1223, %v1224
    %v1226 = vand.u32 %v1225, 4294901760
    %1227 = vmatpush.msra.mxu0 %v1226
    %v1228 = vand.u32 %v103, 4294901760
    %v1229 = vsub.f32 %v103, %v1228
    %v1230 = vand.u32 %v1229, 4294901760
    %v1231 = vsub.f32 %v1229, %v1230
    %v1232 = vand.u32 %v1231, 4294901760
    %1233 = vmatpush.msra.mxu0 %v1232
    %v1234 = vand.u32 %v102, 4294901760
    %v1235 = vsub.f32 %v102, %v1234
    %v1236 = vand.u32 %v1235, 4294901760
    %v1237 = vsub.f32 %v1235, %v1236
    %v1238 = vand.u32 %v1237, 4294901760
    %1239 = vmatpush.msra.mxu0 %v1238
    %v1240 = vand.u32 %v101, 4294901760
    %v1241 = vsub.f32 %v101, %v1240
    %v1242 = vand.u32 %v1241, 4294901760
    %v1243 = vsub.f32 %v1241, %v1242
    %v1244 = vand.u32 %v1243, 4294901760
    %1245 = vmatpush.msra.mxu0 %v1244
    %v1246 = vand.u32 %v100, 4294901760
    %v1247 = vsub.f32 %v100, %v1246
    %v1248 = vand.u32 %v1247, 4294901760
    %v1249 = vsub.f32 %v1247, %v1248
    %v1250 = vand.u32 %v1249, 4294901760
    %1251 = vmatpush.msra.mxu0 %v1250
    %v1252 = vand.u32 %v99, 4294901760
    %v1253 = vsub.f32 %v99, %v1252
    %v1254 = vand.u32 %v1253, 4294901760
    %v1255 = vsub.f32 %v1253, %v1254
    %v1256 = vand.u32 %v1255, 4294901760
    %1257 = vmatpush.msra.mxu0 %v1256
    %v1258 = vand.u32 %v98, 4294901760
    %v1259 = vsub.f32 %v98, %v1258
    %v1260 = vand.u32 %v1259, 4294901760
    %v1261 = vsub.f32 %v1259, %v1260
    %v1262 = vand.u32 %v1261, 4294901760
    %1263 = vmatpush.msra.mxu0 %v1262
    %v1264 = vand.u32 %v97, 4294901760
    %v1265 = vsub.f32 %v97, %v1264
    %v1266 = vand.u32 %v1265, 4294901760
    %v1267 = vsub.f32 %v1265, %v1266
    %v1268 = vand.u32 %v1267, 4294901760
    %1269 = vmatpush.msra.mxu0 %v1268
    %v1270 = vand.u32 %v96, 4294901760
    %v1271 = vsub.f32 %v96, %v1270
    %v1272 = vand.u32 %v1271, 4294901760
    %v1273 = vsub.f32 %v1271, %v1272
    %v1274 = vand.u32 %v1273, 4294901760
    %1275 = vmatpush.msra.mxu0 %v1274
    %v1276 = vand.u32 %v95, 4294901760
    %v1277 = vsub.f32 %v95, %v1276
    %v1278 = vand.u32 %v1277, 4294901760
    %v1279 = vsub.f32 %v1277, %v1278
    %v1280 = vand.u32 %v1279, 4294901760
    %1281 = vmatpush.msra.mxu0 %v1280
    %v1282 = vand.u32 %v117, 4294901760
    %1283 = vmatmul.f32.gmra.mxu0 %v1282
    %v1284 = vpop.f32.mrf.mxu0
    %v1285 = vadd.f32 %v1184, %v1284
    %1286 = vdwg.mxu0
    %v1287 = vand.u32 %v110, 4294901760
    %v1288 = vsub.f32 %v110, %v1287
    %1289 = vmatpush.msra.mxu0 %v1288
    %v1290 = vand.u32 %v109, 4294901760
    %v1291 = vsub.f32 %v109, %v1290
    %1292 = vmatpush.msra.mxu0 %v1291
    %v1293 = vand.u32 %v108, 4294901760
    %v1294 = vsub.f32 %v108, %v1293
    %1295 = vmatpush.msra.mxu0 %v1294
    %v1296 = vand.u32 %v107, 4294901760
    %v1297 = vsub.f32 %v107, %v1296
    %1298 = vmatpush.msra.mxu0 %v1297
    %v1299 = vand.u32 %v106, 4294901760
    %v1300 = vsub.f32 %v106, %v1299
    %1301 = vmatpush.msra.mxu0 %v1300
    %v1302 = vand.u32 %v105, 4294901760
    %v1303 = vsub.f32 %v105, %v1302
    %1304 = vmatpush.msra.mxu0 %v1303
    %v1305 = vand.u32 %v104, 4294901760
    %v1306 = vsub.f32 %v104, %v1305
    %1307 = vmatpush.msra.mxu0 %v1306
    %v1308 = vand.u32 %v103, 4294901760
    %v1309 = vsub.f32 %v103, %v1308
    %1310 = vmatpush.msra.mxu0 %v1309
    %v1311 = vand.u32 %v102, 4294901760
    %v1312 = vsub.f32 %v102, %v1311
    %1313 = vmatpush.msra.mxu0 %v1312
    %v1314 = vand.u32 %v101, 4294901760
    %v1315 = vsub.f32 %v101, %v1314
    %1316 = vmatpush.msra.mxu0 %v1315
    %v1317 = vand.u32 %v100, 4294901760
    %v1318 = vsub.f32 %v100, %v1317
    %1319 = vmatpush.msra.mxu0 %v1318
    %v1320 = vand.u32 %v99, 4294901760
    %v1321 = vsub.f32 %v99, %v1320
    %1322 = vmatpush.msra.mxu0 %v1321
    %v1323 = vand.u32 %v98, 4294901760
    %v1324 = vsub.f32 %v98, %v1323
    %1325 = vmatpush.msra.mxu0 %v1324
    %v1326 = vand.u32 %v97, 4294901760
    %v1327 = vsub.f32 %v97, %v1326
    %1328 = vmatpush.msra.mxu0 %v1327
    %v1329 = vand.u32 %v96, 4294901760
    %v1330 = vsub.f32 %v96, %v1329
    %1331 = vmatpush.msra.mxu0 %v1330
    %v1332 = vand.u32 %v95, 4294901760
    %v1333 = vsub.f32 %v95, %v1332
    %1334 = vmatpush.msra.mxu0 %v1333
    %v1335 = vand.u32 %v117, 4294901760
    %v1336 = vsub.f32 %v117, %v1335
    %1337 = vmatmul.f32.gmra.mxu0 %v1336
    %v1338 = vpop.f32.mrf.mxu0
    %v1339 = vadd.f32 %v1285, %v1338
    %1340 = vdwg.mxu0
    %v1341 = vand.u32 %v110, 4294901760
    %1342 = vmatpush.msra.mxu0 %v1341
    %v1343 = vand.u32 %v109, 4294901760
    %1344 = vmatpush.msra.mxu0 %v1343
    %v1345 = vand.u32 %v108, 4294901760
    %1346 = vmatpush.msra.mxu0 %v1345
    %v1347 = vand.u32 %v107, 4294901760
    %1348 = vmatpush.msra.mxu0 %v1347
    %v1349 = vand.u32 %v106, 4294901760
    %1350 = vmatpush.msra.mxu0 %v1349
    %v1351 = vand.u32 %v105, 4294901760
    %1352 = vmatpush.msra.mxu0 %v1351
    %v1353 = vand.u32 %v104, 4294901760
    %1354 = vmatpush.msra.mxu0 %v1353
    %v1355 = vand.u32 %v103, 4294901760
    %1356 = vmatpush.msra.mxu0 %v1355
    %v1357 = vand.u32 %v102, 4294901760
    %1358 = vmatpush.msra.mxu0 %v1357
    %v1359 = vand.u32 %v101, 4294901760
    %1360 = vmatpush.msra.mxu0 %v1359
    %v1361 = vand.u32 %v100, 4294901760
    %1362 = vmatpush.msra.mxu0 %v1361
    %v1363 = vand.u32 %v99, 4294901760
    %1364 = vmatpush.msra.mxu0 %v1363
    %v1365 = vand.u32 %v98, 4294901760
    %1366 = vmatpush.msra.mxu0 %v1365
    %v1367 = vand.u32 %v97, 4294901760
    %1368 = vmatpush.msra.mxu0 %v1367
    %v1369 = vand.u32 %v96, 4294901760
    %1370 = vmatpush.msra.mxu0 %v1369
    %v1371 = vand.u32 %v95, 4294901760
    %1372 = vmatpush.msra.mxu0 %v1371
    %v1373 = vand.u32 %v117, 4294901760
    %v1374 = vsub.f32 %v117, %v1373
    %v1375 = vand.u32 %v1374, 4294901760
    %1376 = vmatmul.f32.gmra.mxu0 %v1375
    %v1377 = vpop.f32.mrf.mxu0
    %v1378 = vadd.f32 %v1339, %v1377
    %1379 = vdwg.mxu0
    %v1380 = vand.u32 %v110, 4294901760
    %v1381 = vsub.f32 %v110, %v1380
    %v1382 = vand.u32 %v1381, 4294901760
    %1383 = vmatpush.msra.mxu0 %v1382
    %v1384 = vand.u32 %v109, 4294901760
    %v1385 = vsub.f32 %v109, %v1384
    %v1386 = vand.u32 %v1385, 4294901760
    %1387 = vmatpush.msra.mxu0 %v1386
    %v1388 = vand.u32 %v108, 4294901760
    %v1389 = vsub.f32 %v108, %v1388
    %v1390 = vand.u32 %v1389, 4294901760
    %1391 = vmatpush.msra.mxu0 %v1390
    %v1392 = vand.u32 %v107, 4294901760
    %v1393 = vsub.f32 %v107, %v1392
    %v1394 = vand.u32 %v1393, 4294901760
    %1395 = vmatpush.msra.mxu0 %v1394
    %v1396 = vand.u32 %v106, 4294901760
    %v1397 = vsub.f32 %v106, %v1396
    %v1398 = vand.u32 %v1397, 4294901760
    %1399 = vmatpush.msra.mxu0 %v1398
    %v1400 = vand.u32 %v105, 4294901760
    %v1401 = vsub.f32 %v105, %v1400
    %v1402 = vand.u32 %v1401, 4294901760
    %1403 = vmatpush.msra.mxu0 %v1402
    %v1404 = vand.u32 %v104, 4294901760
    %v1405 = vsub.f32 %v104, %v1404
    %v1406 = vand.u32 %v1405, 4294901760
    %1407 = vmatpush.msra.mxu0 %v1406
    %v1408 = vand.u32 %v103, 4294901760
    %v1409 = vsub.f32 %v103, %v1408
    %v1410 = vand.u32 %v1409, 4294901760
    %1411 = vmatpush.msra.mxu0 %v1410
    %v1412 = vand.u32 %v102, 4294901760
    %v1413 = vsub.f32 %v102, %v1412
    %v1414 = vand.u32 %v1413, 4294901760
    %1415 = vmatpush.msra.mxu0 %v1414
    %v1416 = vand.u32 %v101, 4294901760
    %v1417 = vsub.f32 %v101, %v1416
    %v1418 = vand.u32 %v1417, 4294901760
    %1419 = vmatpush.msra.mxu0 %v1418
    %v1420 = vand.u32 %v100, 4294901760
    %v1421 = vsub.f32 %v100, %v1420
    %v1422 = vand.u32 %v1421, 4294901760
    %1423 = vmatpush.msra.mxu0 %v1422
    %v1424 = vand.u32 %v99, 4294901760
    %v1425 = vsub.f32 %v99, %v1424
    %v1426 = vand.u32 %v1425, 4294901760
    %1427 = vmatpush.msra.mxu0 %v1426
    %v1428 = vand.u32 %v98, 4294901760
    %v1429 = vsub.f32 %v98, %v1428
    %v1430 = vand.u32 %v1429, 4294901760
    %1431 = vmatpush.msra.mxu0 %v1430
    %v1432 = vand.u32 %v97, 4294901760
    %v1433 = vsub.f32 %v97, %v1432
    %v1434 = vand.u32 %v1433, 4294901760
    %1435 = vmatpush.msra.mxu0 %v1434
    %v1436 = vand.u32 %v96, 4294901760
    %v1437 = vsub.f32 %v96, %v1436
    %v1438 = vand.u32 %v1437, 4294901760
    %1439 = vmatpush.msra.mxu0 %v1438
    %v1440 = vand.u32 %v95, 4294901760
    %v1441 = vsub.f32 %v95, %v1440
    %v1442 = vand.u32 %v1441, 4294901760
    %1443 = vmatpush.msra.mxu0 %v1442
    %v1444 = vand.u32 %v117, 4294901760
    %1445 = vmatmul.f32.gmra.mxu0 %v1444
    %v1446 = vpop.f32.mrf.mxu0
    %v1447 = vadd.f32 %v1378, %v1446
    %1448 = vdwg.mxu0
    %v1449 = vand.u32 %v110, 4294901760
    %1450 = vmatpush.msra.mxu0 %v1449
    %v1451 = vand.u32 %v109, 4294901760
    %1452 = vmatpush.msra.mxu0 %v1451
    %v1453 = vand.u32 %v108, 4294901760
    %1454 = vmatpush.msra.mxu0 %v1453
    %v1455 = vand.u32 %v107, 4294901760
    %1456 = vmatpush.msra.mxu0 %v1455
    %v1457 = vand.u32 %v106, 4294901760
    %1458 = vmatpush.msra.mxu0 %v1457
    %v1459 = vand.u32 %v105, 4294901760
    %1460 = vmatpush.msra.mxu0 %v1459
    %v1461 = vand.u32 %v104, 4294901760
    %1462 = vmatpush.msra.mxu0 %v1461
    %v1463 = vand.u32 %v103, 4294901760
    %1464 = vmatpush.msra.mxu0 %v1463
    %v1465 = vand.u32 %v102, 4294901760
    %1466 = vmatpush.msra.mxu0 %v1465
    %v1467 = vand.u32 %v101, 4294901760
    %1468 = vmatpush.msra.mxu0 %v1467
    %v1469 = vand.u32 %v100, 4294901760
    %1470 = vmatpush.msra.mxu0 %v1469
    %v1471 = vand.u32 %v99, 4294901760
    %1472 = vmatpush.msra.mxu0 %v1471
    %v1473 = vand.u32 %v98, 4294901760
    %1474 = vmatpush.msra.mxu0 %v1473
    %v1475 = vand.u32 %v97, 4294901760
    %1476 = vmatpush.msra.mxu0 %v1475
    %v1477 = vand.u32 %v96, 4294901760
    %1478 = vmatpush.msra.mxu0 %v1477
    %v1479 = vand.u32 %v95, 4294901760
    %1480 = vmatpush.msra.mxu0 %v1479
    %v1481 = vand.u32 %v117, 4294901760
    %1482 = vmatmul.f32.gmra.mxu0 %v1481
    %v1483 = vpop.f32.mrf.mxu0
    %v1484 = vadd.f32 %v1447, %v1483
    %1485 = vdwg.mxu0
    %1486 = vst [vmem:[#allocation8] sm:$0x1] %v1484
    // Predicated region
    $region22: #{tpu_custom_call.1} parent=1 // pred_check
      _
    $region23: #{tpu_custom_call.1} parent=1 // pred_check_branch
      %1488 = sbr.rel (0) target = $region25
    $region24: #{tpu_custom_call.1} parent=1 // pred_region
      %1490 = vsyncadd [#allocation5], 0
      %s1492 = sshll.u32 [#allocation8], 4
      %s1493 = int_to_ptr.vmem [resolvable:$true] %s1492
      %s1494 = sshll.u32 %s3, 4
      %s1495 = int_to_ptr.hbm [resolvable:$true] %s1494
      %1497 = dma.vmem_to_hbm [thread:$0]  %s1493, 16, %s1495, [#allocation5]
    $region25: #{tpu_custom_call.1} parent=1 // pred_fallthru
      _
    // Predicated region
    $region26: #{tpu_custom_call.1} parent=1 // pred_check
      _
    $region27: #{tpu_custom_call.1} parent=1 // pred_check_branch
      %1499 = sbr.rel (0) target = $region29
    $region28: #{tpu_custom_call.1} parent=1 // pred_region
      %1501 = dma.done [#allocation5], 16
    $region29: #{tpu_custom_call.1} parent=1 // pred_fallthru
      _
    %1502 = vsyncpa [#allocation4], 1
    %1503 = vsyncpa [#allocation7], 1
    %1504 = vsyncpa [#allocation5], 1

</llo_original>
